<compile_context>
chip_gen: v7x
topology: tpu7x:2x2x1
jax: 0.10.0
libtpu: 0.0.40
codegen_flags: <defaults>
</compile_context>

<pallas_src>
import functools

import jax
import jax.numpy as jnp
from jax import lax
from jax.experimental import pallas as pl
from jax.experimental.pallas import tpu as pltpu


def _downsample_kernel(x_ref, w_ref, b_ref, o_ref, *, w2, tm):
    """One grid step of the stride-2 3x3 conv.

    x_ref: (1, 1, 4, C, TMX)  haloed, phase-decomposed input tile (TMX = TM + halo)
    w_ref: (9, Cout, C)       per-tap weights (constant index_map -> resident)
    b_ref: (Cout, 1)          f32 bias column
    o_ref: (1, Cout, TM)      lane-dense output tile (TM multiple of 128)
    """
    cout = o_ref.shape[1]
    # Start the accumulator from the broadcast bias (saves a separate add).
    acc = jnp.broadcast_to(b_ref[...].astype(jnp.float32), (cout, tm))
    # Each tap is a *static* stride-1 slice of the VMEM tile, loaded right
    # before its matmul so nothing large stays live in vregs across the loop.
    for kh in range(3):
        ph, dh = kh % 2, kh // 2
        for kw in range(3):
            pw, dw = kw % 2, kw // 2
            off = dh * w2 + dw                                   # static: 0, 1, w2, w2+1
            x_tap = x_ref[0, 0, ph * 2 + pw, :, off:off + tm]    # (C, TM)
            w_tap = w_ref[kh * 3 + kw]                           # (Cout, C)
            acc = acc + jnp.dot(w_tap, x_tap,
                                preferred_element_type=jnp.float32)
    o_ref[0] = acc.astype(o_ref.dtype)


def _choose_tm(m_wide, n_batch, c_in, c_out, w2, in_bytes, out_bytes):
    # VMEM per lane-column of one grid step: double-buffered input (4 phase
    # slabs) + double-buffered output + f32 accumulator.
    per_col = 2 * (4 * c_in * in_bytes) + 2 * (c_out * out_bytes) + 4 * c_out
    # Resident weights/bias and the input halo columns come off the top.
    fixed = (2 * (9 * c_out * c_in * in_bytes + 4 * c_out)
             + 2 * (4 * c_in * in_bytes) * (w2 + 1))
    budget = 12 * 1024 * 1024 - fixed   # comfortable on v5e/v6e (128 MiB) and v7x (64 MiB)
    tm = max(128, min(2048, (budget // per_col) // 128 * 128))
    tm = min(tm, pl.cdiv(m_wide, 128) * 128)   # no bigger than the (padded) problem
    # Expose >= 4 grid steps when possible so both v7x TensorCores get work.
    while tm >= 256 and n_batch * pl.cdiv(m_wide, tm) < 4:
        tm -= 128
    return tm


def downsample_conv(x_nchw, weight, bias, *, stride=2, padding=1, compute_dtype=None):
    """Downsample.op == Conv2d(C, C, 3, stride=2, padding=1) as a Pallas TPU kernel."""
    N, C, H, W = x_nchw.shape
    Cout, Cin, KH, KW = weight.shape
    assert Cin == C and (KH, KW) == (3, 3) and stride == 2
    # TODO(synk): only the default Downsample config (use_conv=True, dims=2) is
    # implemented; dims=1/3 and the use_conv=False AvgPool path are not.

    Ho = (H + 2 * padding - KH) // stride + 1
    Wo = (W + 2 * padding - KW) // stride + 1
    Hp, Wp = H + 2 * padding, W + 2 * padding
    eh, ew = Hp % 2, Wp % 2                       # make padded dims even (2x2 phases)
    H2, W2 = (Hp + eh) // 2, (Wp + ew) // 2       # = Ho + 1, Wo + 1 for padding=1

    out_dtype = x_nchw.dtype
    in_dtype = compute_dtype if compute_dtype is not None else x_nchw.dtype
    in_bytes = jnp.dtype(in_dtype).itemsize
    out_bytes = jnp.dtype(out_dtype).itemsize

    m_wide = Ho * W2                              # "wide" rows: W2 = Wo+1 cols per row
    tm = _choose_tm(m_wide, N, C, Cout, W2, in_bytes, out_bytes)
    n_tiles = pl.cdiv(m_wide, tm)
    m_pad = n_tiles * tm
    halo = W2 + 1                                 # largest tap offset
    tmx = tm + halo                               # haloed tile width seen by the kernel

    # ---- JAX-side layout glue (pad + space-to-depth + tiny halo gather,
    #      ~1.1x input of HBM traffic vs ~2.25x each way for an im2col X_col) ----
    xp = jnp.pad(x_nchw, ((0, 0), (0, 0),
                          (padding, padding + eh), (padding, padding + ew)))
    # space-to-depth: (N, C, 2*H2, 2*W2) -> (N, 4, C, H2*W2); phase k = ph*2 + pw
    phases = xp.reshape(N, C, H2, 2, W2, 2).transpose(0, 3, 5, 1, 2, 4)
    phases = phases.reshape(N, 4, C, H2 * W2)
    lp = m_pad + halo
    phases = jnp.pad(phases, ((0, 0), (0, 0), (0, 0), (0, lp - H2 * W2)))
    # haloed tiles: every tap of every tile is then a static stride-1 slice in VMEM
    idx = jnp.arange(n_tiles)[:, None] * tm + jnp.arange(tmx)[None, :]
    pht = jnp.take(phases, idx, axis=-1)                      # (N, 4, C, n_tiles, TMX)
    pht = pht.transpose(0, 3, 1, 2, 4).astype(in_dtype)       # (N, n_tiles, 4, C, TMX)

    # weights per tap: (Cout, C, 3, 3) -> (9, Cout, C); bias as an f32 column
    w_k = jnp.transpose(weight, (2, 3, 0, 1)).reshape(KH * KW, Cout, C).astype(in_dtype)
    b_col = bias.reshape(Cout, 1).astype(jnp.float32)

    kernel = functools.partial(_downsample_kernel, w2=W2, tm=tm)

    flops = 2 * N * m_pad * KH * KW * C * Cout
    bytes_accessed = (pht.size * in_bytes + w_k.size * in_bytes
                      + Cout * 4 + N * Cout * m_pad * out_bytes)

    out_flat = pl.pallas_call(
        kernel,
        out_shape=jax.ShapeDtypeStruct((N, Cout, m_pad), out_dtype),
        grid_spec=pltpu.PrefetchScalarGridSpec(
            num_scalar_prefetch=0,
            grid=(N, n_tiles),
            in_specs=[
                pl.BlockSpec((1, 1, 4, C, tmx), lambda n, t: (n, t, 0, 0, 0)),
                # constant index_maps -> fetched once, stay resident in VMEM
                pl.BlockSpec((KH * KW, Cout, C), lambda n, t: (0, 0, 0)),
                pl.BlockSpec((Cout, 1), lambda n, t: (0, 0)),
            ],
            out_specs=pl.BlockSpec((1, Cout, tm), lambda n, t: (n, 0, t)),
        ),
        compiler_params=pltpu.CompilerParams(
            dimension_semantics=("parallel", "parallel"),
            vmem_limit_bytes=48 * 1024 * 1024,
        ),
        cost_estimate=pl.CostEstimate(
            flops=flops, transcendentals=0, bytes_accessed=bytes_accessed),
    )(pht, w_k, b_col)

    # (N, Cout, m_pad) -> NCHW: drop padded tail rows and the extra "wide" column.
    out = out_flat[:, :, :m_wide].reshape(N, Cout, Ho, W2)[..., :Wo]
    return out


if __name__ == "__main__":
    key = jax.random.PRNGKey(0)
    k_x, k_w, k_b = jax.random.split(key, 3)

    # Downsample(channels=4): Conv2d(4, 4, 3, stride=2, padding=1)
    N, C, H, W = 2, 4, 16, 16
    KH = KW = 3
    Cout = C

    x = jax.random.normal(k_x, (N, C, H, W), dtype=jnp.float32)

    # deterministic Kaiming-uniform-like init (same shapes as PyTorch Conv2d)
    fan_in = C * KH * KW
    bound = 1.0 / (fan_in ** 0.5)
    weight = jax.random.uniform(
        k_w, (Cout, C, KH, KW), dtype=jnp.float32, minval=-bound, maxval=bound
    )
    bias = jax.random.uniform(
        k_b, (Cout,), dtype=jnp.float32, minval=-bound, maxval=bound
    )

    out = jax.jit(downsample_conv)(x, weight, bias)
    jax.block_until_ready(out)

    # sanity check against XLA's conv
    ref = lax.conv_general_dilated(
        x, weight, window_strides=(2, 2), padding=((1, 1), (1, 1)),
        dimension_numbers=("NCHW", "OIHW", "NCHW"),
    ) + bias[None, :, None, None]

    assert out.shape == (N, C, H // 2, W // 2), out.shape
    assert jnp.allclose(out, ref, atol=1e-5, rtol=1e-5), "mismatch vs lax.conv reference"

    print("KERNEL_OK")
</pallas_src>

<mosaic_0001>
module attributes {stable_mosaic.version = 11 : i64} {
  func.func @_downsample_kernel(%arg0: i32, %arg1: i32, %arg2: memref<1x1x4x4x138xf32, #tpu.memory_space<vmem>>, %arg3: memref<9x4x4xf32, #tpu.memory_space<vmem>>, %arg4: memref<4x1xf32, #tpu.memory_space<vmem>>, %arg5: memref<1x4x128xf32, #tpu.memory_space<vmem>>) attributes {dimension_semantics = [#tpu.dimension_semantics<parallel>, #tpu.dimension_semantics<parallel>], iteration_bounds = array<i64: 2, 1>, scalar_prefetch = 0 : i64, scratch_operands = 0 : i64, tpu.core_type = #tpu.core_type<tc>, window_params = [{transform_indices = @transform_0, window_bounds = array<i64: 1, 1, 4, 4, 138>}, {pipeline_mode = #tpu.pipeline_mode<synchronous>, transform_indices = @transform_1, window_bounds = array<i64: 9, 4, 4>}, {pipeline_mode = #tpu.pipeline_mode<synchronous>, transform_indices = @transform_2, window_bounds = array<i64: 4, 1>}, {transform_indices = @transform_3, window_bounds = array<i64: 1, 4, 128>}]} {
    %c0 = arith.constant 0 : index
    %c0_0 = arith.constant 0 : index
    %0 = vector.load %arg4[%c0, %c0_0] : memref<4x1xf32, #tpu.memory_space<vmem>>, vector<4x1xf32>
    %1 = vector.shape_cast %0 : vector<4x1xf32> to vector<4x1xf32>
    %2 = vector.broadcast %1 : vector<4x1xf32> to vector<4x128xf32>
    %c0_1 = arith.constant 0 : index
    %c0_2 = arith.constant 0 : index
    %c0_3 = arith.constant 0 : index
    %c0_4 = arith.constant 0 : index
    %c0_5 = arith.constant 0 : index
    %3 = vector.load %arg2[%c0_1, %c0_2, %c0_3, %c0_4, %c0_5] : memref<1x1x4x4x138xf32, #tpu.memory_space<vmem>>, vector<1x1x1x4x128xf32>
    %4 = vector.shape_cast %3 : vector<1x1x1x4x128xf32> to vector<4x128xf32>
    %c0_6 = arith.constant 0 : index
    %c0_7 = arith.constant 0 : index
    %c0_8 = arith.constant 0 : index
    %5 = vector.load %arg3[%c0_6, %c0_7, %c0_8] : memref<9x4x4xf32, #tpu.memory_space<vmem>>, vector<1x4x4xf32>
    %6 = vector.shape_cast %5 : vector<1x4x4xf32> to vector<4x4xf32>
    %cst = arith.constant dense<0.000000e+00> : vector<4x128xf32>
    %7 = tpu.matmul %6, %4, %cst {dimension_numbers = #tpu.dot_dimension_numbers<[1], [0], [0], [1], [0, 0, 1, 1], [], []>} : vector<4x4xf32>, vector<4x128xf32>, vector<4x128xf32> -> vector<4x128xf32>
    %8 = arith.addf %2, %7 : vector<4x128xf32>
    %c0_9 = arith.constant 0 : index
    %c0_10 = arith.constant 0 : index
    %c1 = arith.constant 1 : index
    %c0_11 = arith.constant 0 : index
    %c0_12 = arith.constant 0 : index
    %9 = vector.load %arg2[%c0_9, %c0_10, %c1, %c0_11, %c0_12] : memref<1x1x4x4x138xf32, #tpu.memory_space<vmem>>, vector<1x1x1x4x128xf32>
    %10 = vector.shape_cast %9 : vector<1x1x1x4x128xf32> to vector<4x128xf32>
    %c1_13 = arith.constant 1 : index
    %c0_14 = arith.constant 0 : index
    %c0_15 = arith.constant 0 : index
    %11 = vector.load %arg3[%c1_13, %c0_14, %c0_15] : memref<9x4x4xf32, #tpu.memory_space<vmem>>, vector<1x4x4xf32>
    %12 = vector.shape_cast %11 : vector<1x4x4xf32> to vector<4x4xf32>
    %cst_16 = arith.constant dense<0.000000e+00> : vector<4x128xf32>
    %13 = tpu.matmul %12, %10, %cst_16 {dimension_numbers = #tpu.dot_dimension_numbers<[1], [0], [0], [1], [0, 0, 1, 1], [], []>} : vector<4x4xf32>, vector<4x128xf32>, vector<4x128xf32> -> vector<4x128xf32>
    %14 = arith.addf %8, %13 : vector<4x128xf32>
    %c0_17 = arith.constant 0 : index
    %c0_18 = arith.constant 0 : index
    %c0_19 = arith.constant 0 : index
    %c0_20 = arith.constant 0 : index
    %c1_21 = arith.constant 1 : index
    %15 = vector.load %arg2[%c0_17, %c0_18, %c0_19, %c0_20, %c1_21] : memref<1x1x4x4x138xf32, #tpu.memory_space<vmem>>, vector<1x1x1x4x128xf32>
    %16 = vector.shape_cast %15 : vector<1x1x1x4x128xf32> to vector<4x128xf32>
    %c2 = arith.constant 2 : index
    %c0_22 = arith.constant 0 : index
    %c0_23 = arith.constant 0 : index
    %17 = vector.load %arg3[%c2, %c0_22, %c0_23] : memref<9x4x4xf32, #tpu.memory_space<vmem>>, vector<1x4x4xf32>
    %18 = vector.shape_cast %17 : vector<1x4x4xf32> to vector<4x4xf32>
    %cst_24 = arith.constant dense<0.000000e+00> : vector<4x128xf32>
    %19 = tpu.matmul %18, %16, %cst_24 {dimension_numbers = #tpu.dot_dimension_numbers<[1], [0], [0], [1], [0, 0, 1, 1], [], []>} : vector<4x4xf32>, vector<4x128xf32>, vector<4x128xf32> -> vector<4x128xf32>
    %20 = arith.addf %14, %19 : vector<4x128xf32>
    %c0_25 = arith.constant 0 : index
    %c0_26 = arith.constant 0 : index
    %c2_27 = arith.constant 2 : index
    %c0_28 = arith.constant 0 : index
    %c0_29 = arith.constant 0 : index
    %21 = vector.load %arg2[%c0_25, %c0_26, %c2_27, %c0_28, %c0_29] : memref<1x1x4x4x138xf32, #tpu.memory_space<vmem>>, vector<1x1x1x4x128xf32>
    %22 = vector.shape_cast %21 : vector<1x1x1x4x128xf32> to vector<4x128xf32>
    %c3 = arith.constant 3 : index
    %c0_30 = arith.constant 0 : index
    %c0_31 = arith.constant 0 : index
    %23 = vector.load %arg3[%c3, %c0_30, %c0_31] : memref<9x4x4xf32, #tpu.memory_space<vmem>>, vector<1x4x4xf32>
    %24 = vector.shape_cast %23 : vector<1x4x4xf32> to vector<4x4xf32>
    %cst_32 = arith.constant dense<0.000000e+00> : vector<4x128xf32>
    %25 = tpu.matmul %24, %22, %cst_32 {dimension_numbers = #tpu.dot_dimension_numbers<[1], [0], [0], [1], [0, 0, 1, 1], [], []>} : vector<4x4xf32>, vector<4x128xf32>, vector<4x128xf32> -> vector<4x128xf32>
    %26 = arith.addf %20, %25 : vector<4x128xf32>
    %c0_33 = arith.constant 0 : index
    %c0_34 = arith.constant 0 : index
    %c3_35 = arith.constant 3 : index
    %c0_36 = arith.constant 0 : index
    %c0_37 = arith.constant 0 : index
    %27 = vector.load %arg2[%c0_33, %c0_34, %c3_35, %c0_36, %c0_37] : memref<1x1x4x4x138xf32, #tpu.memory_space<vmem>>, vector<1x1x1x4x128xf32>
    %28 = vector.shape_cast %27 : vector<1x1x1x4x128xf32> to vector<4x128xf32>
    %c4 = arith.constant 4 : index
    %c0_38 = arith.constant 0 : index
    %c0_39 = arith.constant 0 : index
    %29 = vector.load %arg3[%c4, %c0_38, %c0_39] : memref<9x4x4xf32, #tpu.memory_space<vmem>>, vector<1x4x4xf32>
    %30 = vector.shape_cast %29 : vector<1x4x4xf32> to vector<4x4xf32>
    %cst_40 = arith.constant dense<0.000000e+00> : vector<4x128xf32>
    %31 = tpu.matmul %30, %28, %cst_40 {dimension_numbers = #tpu.dot_dimension_numbers<[1], [0], [0], [1], [0, 0, 1, 1], [], []>} : vector<4x4xf32>, vector<4x128xf32>, vector<4x128xf32> -> vector<4x128xf32>
    %32 = arith.addf %26, %31 : vector<4x128xf32>
    %c0_41 = arith.constant 0 : index
    %c0_42 = arith.constant 0 : index
    %c2_43 = arith.constant 2 : index
    %c0_44 = arith.constant 0 : index
    %c1_45 = arith.constant 1 : index
    %33 = vector.load %arg2[%c0_41, %c0_42, %c2_43, %c0_44, %c1_45] : memref<1x1x4x4x138xf32, #tpu.memory_space<vmem>>, vector<1x1x1x4x128xf32>
    %34 = vector.shape_cast %33 : vector<1x1x1x4x128xf32> to vector<4x128xf32>
    %c5 = arith.constant 5 : index
    %c0_46 = arith.constant 0 : index
    %c0_47 = arith.constant 0 : index
    %35 = vector.load %arg3[%c5, %c0_46, %c0_47] : memref<9x4x4xf32, #tpu.memory_space<vmem>>, vector<1x4x4xf32>
    %36 = vector.shape_cast %35 : vector<1x4x4xf32> to vector<4x4xf32>
    %cst_48 = arith.constant dense<0.000000e+00> : vector<4x128xf32>
    %37 = tpu.matmul %36, %34, %cst_48 {dimension_numbers = #tpu.dot_dimension_numbers<[1], [0], [0], [1], [0, 0, 1, 1], [], []>} : vector<4x4xf32>, vector<4x128xf32>, vector<4x128xf32> -> vector<4x128xf32>
    %38 = arith.addf %32, %37 : vector<4x128xf32>
    %c0_49 = arith.constant 0 : index
    %c0_50 = arith.constant 0 : index
    %c0_51 = arith.constant 0 : index
    %c0_52 = arith.constant 0 : index
    %c9 = arith.constant 9 : index
    %39 = vector.load %arg2[%c0_49, %c0_50, %c0_51, %c0_52, %c9] : memref<1x1x4x4x138xf32, #tpu.memory_space<vmem>>, vector<1x1x1x4x128xf32>
    %40 = vector.shape_cast %39 : vector<1x1x1x4x128xf32> to vector<4x128xf32>
    %c6 = arith.constant 6 : index
    %c0_53 = arith.constant 0 : index
    %c0_54 = arith.constant 0 : index
    %41 = vector.load %arg3[%c6, %c0_53, %c0_54] : memref<9x4x4xf32, #tpu.memory_space<vmem>>, vector<1x4x4xf32>
    %42 = vector.shape_cast %41 : vector<1x4x4xf32> to vector<4x4xf32>
    %cst_55 = arith.constant dense<0.000000e+00> : vector<4x128xf32>
    %43 = tpu.matmul %42, %40, %cst_55 {dimension_numbers = #tpu.dot_dimension_numbers<[1], [0], [0], [1], [0, 0, 1, 1], [], []>} : vector<4x4xf32>, vector<4x128xf32>, vector<4x128xf32> -> vector<4x128xf32>
    %44 = arith.addf %38, %43 : vector<4x128xf32>
    %c0_56 = arith.constant 0 : index
    %c0_57 = arith.constant 0 : index
    %c1_58 = arith.constant 1 : index
    %c0_59 = arith.constant 0 : index
    %c9_60 = arith.constant 9 : index
    %45 = vector.load %arg2[%c0_56, %c0_57, %c1_58, %c0_59, %c9_60] : memref<1x1x4x4x138xf32, #tpu.memory_space<vmem>>, vector<1x1x1x4x128xf32>
    %46 = vector.shape_cast %45 : vector<1x1x1x4x128xf32> to vector<4x128xf32>
    %c7 = arith.constant 7 : index
    %c0_61 = arith.constant 0 : index
    %c0_62 = arith.constant 0 : index
    %47 = vector.load %arg3[%c7, %c0_61, %c0_62] : memref<9x4x4xf32, #tpu.memory_space<vmem>>, vector<1x4x4xf32>
    %48 = vector.shape_cast %47 : vector<1x4x4xf32> to vector<4x4xf32>
    %cst_63 = arith.constant dense<0.000000e+00> : vector<4x128xf32>
    %49 = tpu.matmul %48, %46, %cst_63 {dimension_numbers = #tpu.dot_dimension_numbers<[1], [0], [0], [1], [0, 0, 1, 1], [], []>} : vector<4x4xf32>, vector<4x128xf32>, vector<4x128xf32> -> vector<4x128xf32>
    %50 = arith.addf %44, %49 : vector<4x128xf32>
    %c0_64 = arith.constant 0 : index
    %c0_65 = arith.constant 0 : index
    %c0_66 = arith.constant 0 : index
    %c0_67 = arith.constant 0 : index
    %c10 = arith.constant 10 : index
    %51 = vector.load %arg2[%c0_64, %c0_65, %c0_66, %c0_67, %c10] : memref<1x1x4x4x138xf32, #tpu.memory_space<vmem>>, vector<1x1x1x4x128xf32>
    %52 = vector.shape_cast %51 : vector<1x1x1x4x128xf32> to vector<4x128xf32>
    %c8 = arith.constant 8 : index
    %c0_68 = arith.constant 0 : index
    %c0_69 = arith.constant 0 : index
    %53 = vector.load %arg3[%c8, %c0_68, %c0_69] : memref<9x4x4xf32, #tpu.memory_space<vmem>>, vector<1x4x4xf32>
    %54 = vector.shape_cast %53 : vector<1x4x4xf32> to vector<4x4xf32>
    %cst_70 = arith.constant dense<0.000000e+00> : vector<4x128xf32>
    %55 = tpu.matmul %54, %52, %cst_70 {dimension_numbers = #tpu.dot_dimension_numbers<[1], [0], [0], [1], [0, 0, 1, 1], [], []>} : vector<4x4xf32>, vector<4x128xf32>, vector<4x128xf32> -> vector<4x128xf32>
    %56 = arith.addf %50, %55 : vector<4x128xf32>
    %c0_71 = arith.constant 0 : index
    %c0_72 = arith.constant 0 : index
    %c0_73 = arith.constant 0 : index
    %57 = vector.load %arg5[%c0_71, %c0_72, %c0_73] : memref<1x4x128xf32, #tpu.memory_space<vmem>>, vector<1x4x128xf32>
    %58 = vector.shape_cast %57 : vector<1x4x128xf32> to vector<4x128xf32>
    %59 = vector.shape_cast %56 : vector<4x128xf32> to vector<1x4x128xf32>
    tpu.vector_store %arg5[%c0_71, %c0_72, %c0_73], %59 {strides = array<i32>} : memref<1x4x128xf32, #tpu.memory_space<vmem>>, vector<1x4x128xf32>,
    return
  }
  func.func @transform_0(%arg0: i32, %arg1: i32) -> (i32, i32, i32, i32, i32) {
    %c0_i32 = arith.constant 0 : i32
    %c0_i32_0 = arith.constant 0 : i32
    %c0_i32_1 = arith.constant 0 : i32
    %c0_i32_2 = arith.constant 0 : i32
    return %arg0, %arg1, %c0_i32, %c0_i32_0, %c0_i32_1 : i32, i32, i32, i32, i32
  }
  func.func @transform_1(%arg0: i32, %arg1: i32) -> (i32, i32, i32) {
    %c0_i32 = arith.constant 0 : i32
    %c0_i32_0 = arith.constant 0 : i32
    %c0_i32_1 = arith.constant 0 : i32
    %c0_i32_2 = arith.constant 0 : i32
    return %c0_i32, %c0_i32_0, %c0_i32_1 : i32, i32, i32
  }
  func.func @transform_2(%arg0: i32, %arg1: i32) -> (i32, i32) {
    %c0_i32 = arith.constant 0 : i32
    %c0_i32_0 = arith.constant 0 : i32
    %c0_i32_1 = arith.constant 0 : i32
    return %c0_i32, %c0_i32_0 : i32, i32
  }
  func.func @transform_3(%arg0: i32, %arg1: i32) -> (i32, i32, i32) {
    %c0_i32 = arith.constant 0 : i32
    %c0_i32_0 = arith.constant 0 : i32
    return %arg0, %c0_i32, %arg1 : i32, i32, i32
  }
}

</mosaic_0001>

<llo_original>
// kernel: downsample_conv.1
$region0: #{downsample_conv.1}
  #allocation0 [shape = 'u32[]', space=smem, size = 0x4, offset = 0x4, fixed_abs, tag = 'smem constant byte address 0x4 - core index']
  #allocation1 [shape = 'u32[144,128]{1,0:T(1,128)}', space=vmem, size = 0x12000, scoped, tag = 'internal scratch']
  %s0 = inlined_call_operand.vmem [shape: f32[2,1,4,4,138], index: 0, kind: input, shape index: {}]
  %s1 = inlined_call_operand.vmem [shape: f32[9,4,4], index: 1, kind: input, shape index: {}]
  %s2 = inlined_call_operand.vmem [shape: f32[4,1], index: 2, kind: input, shape index: {}]
  %s3 = inlined_call_operand.vmem [shape: f32[2,4,128], index: 3, kind: output, shape index: {}]
  %s4 = sld [smem:[#allocation0]]
  $region45: #{downsample_conv.1} parent=0
    _
  %s6 = ssub.s32 1, %s4
  %s7 = scalar_select 0, %s6, %s4
  loop: start=0, step=1, limit=4
  $region2: #{downsample_conv.1} parent=0 // loop_pre_header
    _
  $region3: #{downsample_conv.1} parent=0 // loop_header
    %s9 = sphi 0, %s13
    %p10 = scmp.ge.s32.totalorder %s9, 4
    %s16 = sphi 0, %s28
    %s17 = sphi 0, %s24
    %s18 = sphi 0, %s16
    %s19 = sphi 0, %s17
    %s20 = sphi 0, %s18
    %s21 = sphi 0, %s19
    %s33 = sphi 0, %s35
    %s36 = sphi 0, %s33
    %s37 = sphi 0, %s36
    %s53 = sphi 0, %s37
    %s57 = sphi 0, %s57
    %s59 = sphi 0, %s57
    %s60 = sphi 0, %s59
    %s74 = sphi 0, %s60
    %s78 = sphi 0, %s78
    %s80 = sphi 0, %s78
    %s81 = sphi 0, %s80
    %s95 = sphi 0, %s81
    %s103 = sphi 0, %s105
    %s106 = sphi 0, %s103
    %s107 = sphi 0, %s106
    %s123 = sphi 0, %s107
  $region4: #{downsample_conv.1} parent=0 // loop_header_branch
    %12 = sbr.rel (%p10) target = $region8
  $region5: #{downsample_conv.1} parent=0 // loop_body
    %s14 = ssub.s32 %s9, 1
    %s15 = ssub.s32 %s9, 2
    %s22 = sadd.s32 1, %s17
    %p23 = scmp.ge.s32.totalorder %s22, 1
    %s24 = scalar_select %p23, 0, %s22
    %s25 = sadd.s32 1, %s16
    %s26 = scalar_select %p23, %s25, %s16
    %p27 = scmp.ge.s32.totalorder %s26, 2
    %s28 = scalar_select %p27, 0, %s26
    %s29 = ssub.s32 %s16, %s28
    %s30 = ssub.s32 %s17, %s24
    %s31 = sor.u32 %s29, %s30
    %p32 = scmp.eq.s32.totalorder %s31, 0
    %s34 = sadd.s32 %s33, 1
    %s35 = scalar_select %p32, %s33, %s34
    %p38 = pneg %p32
    %p39 = scmp.eq.s32.totalorder %s9, 1
    %p40 = por %p38, %p39
    %p41 = scmp.ne.s32.totalorder %s33, %s36
    %p42 = scmp.eq.s32.totalorder %s9, 0
    %p43 = por %p41, %p42
    %p44 = scmp.ne.s32.totalorder %s33, %s36
    %p45 = scmp.eq.s32.totalorder %s14, 1
    %p46 = por %p44, %p45
    %p47 = scmp.ne.s32.totalorder %s36, %s37
    %p48 = scmp.eq.s32.totalorder %s14, 0
    %p49 = por %p47, %p48
    %p50 = scmp.ne.s32.totalorder %s36, %s37
    %p51 = scmp.eq.s32.totalorder %s15, 1
    %p52 = por %p50, %p51
    %p54 = scmp.ne.s32.totalorder %s37, %s53
    %p55 = scmp.eq.s32.totalorder %s15, 0
    %p56 = por %p54, %p55
    %s58 = sadd.s32 %s57, 1
    %p61 = scmp.eq.s32.totalorder %s9, 1
    %p62 = scmp.ne.s32.totalorder %s57, %s59
    %p63 = scmp.eq.s32.totalorder %s9, 0
    %p64 = por %p62, %p63
    %p65 = scmp.ne.s32.totalorder %s57, %s59
    %p66 = scmp.eq.s32.totalorder %s14, 1
    %p67 = por %p65, %p66
    %p68 = scmp.ne.s32.totalorder %s59, %s60
    %p69 = scmp.eq.s32.totalorder %s14, 0
    %p70 = por %p68, %p69
    %p71 = scmp.ne.s32.totalorder %s59, %s60
    %p72 = scmp.eq.s32.totalorder %s15, 1
    %p73 = por %p71, %p72
    %p75 = scmp.ne.s32.totalorder %s60, %s74
    %p76 = scmp.eq.s32.totalorder %s15, 0
    %p77 = por %p75, %p76
    %s79 = sadd.s32 %s78, 1
    %p82 = scmp.eq.s32.totalorder %s9, 1
    %p83 = scmp.ne.s32.totalorder %s78, %s80
    %p84 = scmp.eq.s32.totalorder %s9, 0
    %p85 = por %p83, %p84
    %p86 = scmp.ne.s32.totalorder %s78, %s80
    %p87 = scmp.eq.s32.totalorder %s14, 1
    %p88 = por %p86, %p87
    %p89 = scmp.ne.s32.totalorder %s80, %s81
    %p90 = scmp.eq.s32.totalorder %s14, 0
    %p91 = por %p89, %p90
    %p92 = scmp.ne.s32.totalorder %s80, %s81
    %p93 = scmp.eq.s32.totalorder %s15, 1
    %p94 = por %p92, %p93
    %p96 = scmp.ne.s32.totalorder %s81, %s95
    %p97 = scmp.eq.s32.totalorder %s15, 0
    %p98 = por %p96, %p97
    %s99 = ssub.s32 %s16, %s28
    %s100 = ssub.s32 %s17, %s24
    %s101 = sor.u32 %s99, %s100
    %p102 = scmp.eq.s32.totalorder %s101, 0
    %s104 = sadd.s32 %s103, 1
    %s105 = scalar_select %p102, %s103, %s104
    %p108 = pneg %p102
    %p109 = scmp.eq.s32.totalorder %s9, 1
    %p110 = por %p108, %p109
    %p111 = scmp.ne.s32.totalorder %s103, %s106
    %p112 = scmp.eq.s32.totalorder %s9, 0
    %p113 = por %p111, %p112
    %p114 = scmp.ne.s32.totalorder %s103, %s106
    %p115 = scmp.eq.s32.totalorder %s14, 1
    %p116 = por %p114, %p115
    %p117 = scmp.ne.s32.totalorder %s106, %s107
    %p118 = scmp.eq.s32.totalorder %s14, 0
    %p119 = por %p117, %p118
    %p120 = scmp.ne.s32.totalorder %s106, %s107
    %p121 = scmp.eq.s32.totalorder %s15, 1
    %p122 = por %p120, %p121
    %p124 = scmp.ne.s32.totalorder %s107, %s123
    %p125 = scmp.eq.s32.totalorder %s15, 0
    %p126 = por %p124, %p125
    %p127 = scmp.le.s32.totalorder 1, %s9
    %p128 = scmp.lt.s32.totalorder %s9, 3
    %p129 = pnand %p127, %p128
    %p130 = pneg %p129
    // Predicated region
    $region9: #{downsample_conv.1} parent=5 // pred_check
      _
    $region10: #{downsample_conv.1} parent=5 // pred_check_branch
      %132 = sbr.rel (%p129) target = $region12
    $region11: #{downsample_conv.1} parent=5 // pred_region
      %s133 = ssub.s32 %s9, 1
      // Predicated region
      $region13: #{downsample_conv.1} parent=11 // pred_check
        %p134 = pneg %p70
      $region14: #{downsample_conv.1} parent=11 // pred_check_branch
        %136 = sbr.rel (%p134) target = $region16
      $region15: #{downsample_conv.1} parent=11 // pred_region
        _
      $region16: #{downsample_conv.1} parent=11 // pred_fallthru
        _
      // Predicated region
      $region17: #{downsample_conv.1} parent=11 // pred_check
        %p137 = pneg %p91
      $region18: #{downsample_conv.1} parent=11 // pred_check_branch
        %139 = sbr.rel (%p137) target = $region20
      $region19: #{downsample_conv.1} parent=11 // pred_region
        _
      $region20: #{downsample_conv.1} parent=11 // pred_fallthru
        _
    $region12: #{downsample_conv.1} parent=5 // pred_fallthru
      _
    %p140 = scmp.lt.s32.totalorder %s9, 2
    // Predicated region
    $region21: #{downsample_conv.1} parent=5 // pred_check
      %p141 = pneg %p140
    $region22: #{downsample_conv.1} parent=5 // pred_check_branch
      %143 = sbr.rel (%p141) target = $region24
    $region23: #{downsample_conv.1} parent=5 // pred_region
      // Predicated region
      $region25: #{downsample_conv.1} parent=23 // pred_check
        %p144 = pneg %p43
      $region26: #{downsample_conv.1} parent=23 // pred_check_branch
        %146 = sbr.rel (%p144) target = $region28
      $region27: #{downsample_conv.1} parent=23 // pred_region
        %p147 = scmp.lt.s32.totalorder %s16, 1
        %s148 = scalar_select %p147, %s16, 1
        %p149 = scmp.lt.s32.totalorder %s17, 0
        %s150 = scalar_select %p149, %s17, 0
        %s151 = smul.addr %s150, 8
        %s152 = smul.addr %s148, 8
        %s153 = sadd.s32 %s151, %s152
        %s154 = smul.addr %s153, 4
        %s155 = scalar_lea.vmem %s0, %s154
      $region28: #{downsample_conv.1} parent=23 // pred_fallthru
        _
    $region24: #{downsample_conv.1} parent=5 // pred_fallthru
      _
    %p156 = scmp.le.s32.totalorder 1, %s9
    %p157 = scmp.lt.s32.totalorder %s9, 3
    %p158 = pnand %p156, %p157
    %p159 = pneg %p158
    // Predicated region
    $region29: #{downsample_conv.1} parent=5 // pred_check
      _
    $region30: #{downsample_conv.1} parent=5 // pred_check_branch
      %161 = sbr.rel (%p158) target = $region32
    $region31: #{downsample_conv.1} parent=5 // pred_region
      %s162 = ssub.s32 %s9, 1
      %p163 = scmp.lt.s32.totalorder %s18, 1
      %s164 = scalar_select %p163, %s18, 1
      %p165 = scmp.lt.s32.totalorder %s19, 0
      %s166 = scalar_select %p165, %s19, 0
      %s167 = smul.addr %s166, 8
      %s168 = smul.addr %s164, 8
      %s169 = sadd.s32 %s167, %s168
      %s170 = smul.addr %s169, 4
      %s171 = scalar_lea.vmem %s0, %s170
      %p172 = pneg %p49
      %p173 = pneg %p46
      %p174 = pneg %p70
      %p175 = pneg %p67
      %p176 = pneg %p91
      %p177 = pneg %p88
      %p178 = pneg %p119
      %p179 = pneg %p116
      %p180 = scmp.lt.s32.totalorder %s18, 1
      %s181 = scalar_select %p180, %s18, 1
      %p182 = scmp.lt.s32.totalorder %s19, 0
      %s183 = scalar_select %p182, %s19, 0
      %s184 = sadd.s32 %s183, %s181
      %s185 = smul.addr %s184, 4
      %s186 = scalar_lea.vmem %s3, %s185
      %p187 = scmp.lt.s32.totalorder %s18, 1
      %s188 = scalar_select %p187, %s18, 1
      %p189 = scmp.lt.s32.totalorder %s19, 0
      %s190 = scalar_select %p189, %s19, 0
      %s191 = smul.addr %s190, 8
      %s192 = smul.addr %s188, 8
      %s193 = sadd.s32 %s191, %s192
      %s194 = smul.addr %s193, 4
      %s195 = scalar_lea.vmem %s0, %s194
      %p196 = scmp.lt.s32.totalorder %s18, 1
      %s197 = scalar_select %p196, %s18, 1
      %p198 = scmp.lt.s32.totalorder %s19, 0
      %s199 = scalar_select %p198, %s19, 0
      %s200 = sadd.s32 %s199, %s197
      %s201 = smul.addr %s200, 4
      %s202 = scalar_lea.vmem %s3, %s201
      %v203 = vld [vmem:[%s2] sm:$0xf]
      %205 = vset.pattern.permute.xlu0 0
      %206 = vperm.xlu0 %205, %v203
      %v207 = vpop.permute.xlu0 %206
      %v209 = vld [vmem:[%s195] sm:$0xf]
      %v210 = vld [vmem:[%s1] sm:$0xf]
      %vm211 = vcmask 31744
      %v213 = vsel %vm211, %v210, 0
      %vm215 = vcmask 1043456
      %v217 = vsel %vm215, %v209, 0
      %219 = vmatprep.subr.mxu0 0.0
      %220 = vmatpush1.msra.mxu0 %v217
      %221 = vmatprep.subr.mxu0 0.0
      %222 = vmatpush1.msra.mxu0 0.0
      %223 = vmatprep.subr.mxu0 0.0
      %224 = vmatpush1.msra.mxu0 0.0
      %225 = vmatprep.subr.mxu0 0.0
      %226 = vmatpush1.msra.mxu0 0.0
      %227 = vmatprep.subr.mxu0 0.0
      %228 = vmatpush1.msra.mxu0 0.0
      %229 = vmatprep.subr.mxu0 0.0
      %230 = vmatpush1.msra.mxu0 0.0
      %231 = vmatprep.subr.mxu0 0.0
      %232 = vmatpush1.msra.mxu0 0.0
      %233 = vmatprep.subr.mxu0 0.0
      %234 = vmatpush1.msra.mxu0 0.0
      %235 = vmatprep.subr.mxu0 0.0
      %236 = vmatpush1.msra.mxu0 0.0
      %237 = vmatprep.subr.mxu0 0.0
      %238 = vmatpush1.msra.mxu0 0.0
      %239 = vmatprep.subr.mxu0 0.0
      %240 = vmatpush1.msra.mxu0 0.0
      %241 = vmatprep.subr.mxu0 0.0
      %242 = vmatpush1.msra.mxu0 0.0
      %243 = vmatprep.subr.mxu0 0.0
      %244 = vmatpush1.msra.mxu0 0.0
      %245 = vmatprep.subr.mxu0 0.0
      %246 = vmatpush1.msra.mxu0 0.0
      %247 = vmatprep.subr.mxu0 0.0
      %248 = vmatpush1.msra.mxu0 0.0
      %249 = vmatprep.subr.mxu0 0.0
      %250 = vmatpush1.msra.mxu0 0.0
      %251 = vmatprep.subr.mxu0 0.0
      %252 = vmatpush1.msra.mxu0 0.0
      %253 = vmatprep.subr.mxu0 0.0
      %254 = vmatpush1.msra.mxu0 0.0
      %255 = vmatprep.subr.mxu0 0.0
      %256 = vmatpush1.msra.mxu0 0.0
      %257 = vmatprep.subr.mxu0 0.0
      %258 = vmatpush1.msra.mxu0 0.0
      %259 = vmatprep.subr.mxu0 0.0
      %260 = vmatpush1.msra.mxu0 0.0
      %261 = vmatprep.subr.mxu0 0.0
      %262 = vmatpush1.msra.mxu0 0.0
      %263 = vmatprep.subr.mxu0 0.0
      %264 = vmatpush1.msra.mxu0 0.0
      %265 = vmatprep.subr.mxu0 0.0
      %266 = vmatpush1.msra.mxu0 0.0
      %267 = vmatprep.subr.mxu0 0.0
      %268 = vmatpush1.msra.mxu0 0.0
      %269 = vmatprep.subr.mxu0 0.0
      %270 = vmatpush1.msra.mxu0 0.0
      %271 = vmatprep.subr.mxu0 0.0
      %272 = vmatpush1.msra.mxu0 0.0
      %273 = vmatprep.subr.mxu0 0.0
      %274 = vmatpush1.msra.mxu0 0.0
      %275 = vmatprep.subr.mxu0 0.0
      %276 = vmatpush1.msra.mxu0 0.0
      %277 = vmatprep.subr.mxu0 0.0
      %278 = vmatpush1.msra.mxu0 0.0
      %279 = vmatprep.subr.mxu0 0.0
      %280 = vmatpush1.msra.mxu0 0.0
      %281 = vmatprep.subr.mxu0 0.0
      %282 = vmatpush1.msra.mxu0 0.0
      %283 = vmatprep.mubr.f32.mxu0 0.0
      %284 = vmatmul.mubr.f32.gmra.mrb[0].mxu0 %v213
      %v285 = vpop.f32.mrb[0].mxu0
      %v286 = vadd.f32 0.0, %v285
      %v287 = vpop.f32.mrb[0].mxu0
      %288 = vdwg.mxu0
      %v289 = vadd.f32 %v207, %v286
      %s290 = scalar_lea.vmem %s195, 8
      %v291 = vld [vmem:[%s290] sm:$0xf]
      %s292 = scalar_lea.vmem %s1, 4
      %v293 = vld [vmem:[%s292] sm:$0xf]
      %v295 = vsel %vm211, %v293, 0
      %v298 = vsel %vm215, %v291, 0
      %300 = vmatprep.subr.mxu0 0.0
      %301 = vmatpush1.msra.mxu0 %v298
      %302 = vmatprep.subr.mxu0 0.0
      %303 = vmatpush1.msra.mxu0 0.0
      %304 = vmatprep.subr.mxu0 0.0
      %305 = vmatpush1.msra.mxu0 0.0
      %306 = vmatprep.subr.mxu0 0.0
      %307 = vmatpush1.msra.mxu0 0.0
      %308 = vmatprep.subr.mxu0 0.0
      %309 = vmatpush1.msra.mxu0 0.0
      %310 = vmatprep.subr.mxu0 0.0
      %311 = vmatpush1.msra.mxu0 0.0
      %312 = vmatprep.subr.mxu0 0.0
      %313 = vmatpush1.msra.mxu0 0.0
      %314 = vmatprep.subr.mxu0 0.0
      %315 = vmatpush1.msra.mxu0 0.0
      %316 = vmatprep.subr.mxu0 0.0
      %317 = vmatpush1.msra.mxu0 0.0
      %318 = vmatprep.subr.mxu0 0.0
      %319 = vmatpush1.msra.mxu0 0.0
      %320 = vmatprep.subr.mxu0 0.0
      %321 = vmatpush1.msra.mxu0 0.0
      %322 = vmatprep.subr.mxu0 0.0
      %323 = vmatpush1.msra.mxu0 0.0
      %324 = vmatprep.subr.mxu0 0.0
      %325 = vmatpush1.msra.mxu0 0.0
      %326 = vmatprep.subr.mxu0 0.0
      %327 = vmatpush1.msra.mxu0 0.0
      %328 = vmatprep.subr.mxu0 0.0
      %329 = vmatpush1.msra.mxu0 0.0
      %330 = vmatprep.subr.mxu0 0.0
      %331 = vmatpush1.msra.mxu0 0.0
      %332 = vmatprep.subr.mxu0 0.0
      %333 = vmatpush1.msra.mxu0 0.0
      %334 = vmatprep.subr.mxu0 0.0
      %335 = vmatpush1.msra.mxu0 0.0
      %336 = vmatprep.subr.mxu0 0.0
      %337 = vmatpush1.msra.mxu0 0.0
      %338 = vmatprep.subr.mxu0 0.0
      %339 = vmatpush1.msra.mxu0 0.0
      %340 = vmatprep.subr.mxu0 0.0
      %341 = vmatpush1.msra.mxu0 0.0
      %342 = vmatprep.subr.mxu0 0.0
      %343 = vmatpush1.msra.mxu0 0.0
      %344 = vmatprep.subr.mxu0 0.0
      %345 = vmatpush1.msra.mxu0 0.0
      %346 = vmatprep.subr.mxu0 0.0
      %347 = vmatpush1.msra.mxu0 0.0
      %348 = vmatprep.subr.mxu0 0.0
      %349 = vmatpush1.msra.mxu0 0.0
      %350 = vmatprep.subr.mxu0 0.0
      %351 = vmatpush1.msra.mxu0 0.0
      %352 = vmatprep.subr.mxu0 0.0
      %353 = vmatpush1.msra.mxu0 0.0
      %354 = vmatprep.subr.mxu0 0.0
      %355 = vmatpush1.msra.mxu0 0.0
      %356 = vmatprep.subr.mxu0 0.0
      %357 = vmatpush1.msra.mxu0 0.0
      %358 = vmatprep.subr.mxu0 0.0
      %359 = vmatpush1.msra.mxu0 0.0
      %360 = vmatprep.subr.mxu0 0.0
      %361 = vmatpush1.msra.mxu0 0.0
      %362 = vmatprep.subr.mxu0 0.0
      %363 = vmatpush1.msra.mxu0 0.0
      %364 = vmatprep.mubr.f32.mxu0 0.0
      %365 = vmatmul.mubr.f32.gmra.mrb[0].mxu0 %v295
      %v366 = vpop.f32.mrb[0].mxu0
      %v367 = vadd.f32 0.0, %v366
      %v368 = vpop.f32.mrb[0].mxu0
      %369 = vdwg.mxu0
      %v370 = vadd.f32 %v289, %v367
      %v371 = vld [vmem:[%s195] sm:$0xff]
      %s372 = scalar_lea.vmem %s1, 8
      %v373 = vld [vmem:[%s372] sm:$0xf]
      %v375 = vcombine.high %v371, %v371
      %376 = vrot.lane.b32.xlu0 %v371, 127
      %v377 = vpop.permute.xlu0 %376
      %378 = vrot.lane.b32.xlu0 %v375, 127
      %v379 = vpop.permute.xlu0 %378
      %vm380 = vcmask 1039360
      %v381 = vsel %vm380, %v377, %v379
      %v383 = vsel %vm211, %v373, 0
      %v385 = vsel %vm215, %v381, 0
      %387 = vmatprep.subr.mxu0 0.0
      %388 = vmatpush1.msra.mxu0 %v385
      %389 = vmatprep.subr.mxu0 0.0
      %390 = vmatpush1.msra.mxu0 0.0
      %391 = vmatprep.subr.mxu0 0.0
      %392 = vmatpush1.msra.mxu0 0.0
      %393 = vmatprep.subr.mxu0 0.0
      %394 = vmatpush1.msra.mxu0 0.0
      %395 = vmatprep.subr.mxu0 0.0
      %396 = vmatpush1.msra.mxu0 0.0
      %397 = vmatprep.subr.mxu0 0.0
      %398 = vmatpush1.msra.mxu0 0.0
      %399 = vmatprep.subr.mxu0 0.0
      %400 = vmatpush1.msra.mxu0 0.0
      %401 = vmatprep.subr.mxu0 0.0
      %402 = vmatpush1.msra.mxu0 0.0
      %403 = vmatprep.subr.mxu0 0.0
      %404 = vmatpush1.msra.mxu0 0.0
      %405 = vmatprep.subr.mxu0 0.0
      %406 = vmatpush1.msra.mxu0 0.0
      %407 = vmatprep.subr.mxu0 0.0
      %408 = vmatpush1.msra.mxu0 0.0
      %409 = vmatprep.subr.mxu0 0.0
      %410 = vmatpush1.msra.mxu0 0.0
      %411 = vmatprep.subr.mxu0 0.0
      %412 = vmatpush1.msra.mxu0 0.0
      %413 = vmatprep.subr.mxu0 0.0
      %414 = vmatpush1.msra.mxu0 0.0
      %415 = vmatprep.subr.mxu0 0.0
      %416 = vmatpush1.msra.mxu0 0.0
      %417 = vmatprep.subr.mxu0 0.0
      %418 = vmatpush1.msra.mxu0 0.0
      %419 = vmatprep.subr.mxu0 0.0
      %420 = vmatpush1.msra.mxu0 0.0
      %421 = vmatprep.subr.mxu0 0.0
      %422 = vmatpush1.msra.mxu0 0.0
      %423 = vmatprep.subr.mxu0 0.0
      %424 = vmatpush1.msra.mxu0 0.0
      %425 = vmatprep.subr.mxu0 0.0
      %426 = vmatpush1.msra.mxu0 0.0
      %427 = vmatprep.subr.mxu0 0.0
      %428 = vmatpush1.msra.mxu0 0.0
      %429 = vmatprep.subr.mxu0 0.0
      %430 = vmatpush1.msra.mxu0 0.0
      %431 = vmatprep.subr.mxu0 0.0
      %432 = vmatpush1.msra.mxu0 0.0
      %433 = vmatprep.subr.mxu0 0.0
      %434 = vmatpush1.msra.mxu0 0.0
      %435 = vmatprep.subr.mxu0 0.0
      %436 = vmatpush1.msra.mxu0 0.0
      %437 = vmatprep.subr.mxu0 0.0
      %438 = vmatpush1.msra.mxu0 0.0
      %439 = vmatprep.subr.mxu0 0.0
      %440 = vmatpush1.msra.mxu0 0.0
      %441 = vmatprep.subr.mxu0 0.0
      %442 = vmatpush1.msra.mxu0 0.0
      %443 = vmatprep.subr.mxu0 0.0
      %444 = vmatpush1.msra.mxu0 0.0
      %445 = vmatprep.subr.mxu0 0.0
      %446 = vmatpush1.msra.mxu0 0.0
      %447 = vmatprep.subr.mxu0 0.0
      %448 = vmatpush1.msra.mxu0 0.0
      %449 = vmatprep.subr.mxu0 0.0
      %450 = vmatpush1.msra.mxu0 0.0
      %451 = vmatprep.mubr.f32.mxu0 0.0
      %452 = vmatmul.mubr.f32.gmra.mrb[0].mxu0 %v383
      %v453 = vpop.f32.mrb[0].mxu0
      %v454 = vadd.f32 0.0, %v453
      %v455 = vpop.f32.mrb[0].mxu0
      %456 = vdwg.mxu0
      %v457 = vadd.f32 %v370, %v454
      %s458 = scalar_lea.vmem %s195, 16
      %v459 = vld [vmem:[%s458] sm:$0xf]
      %s460 = scalar_lea.vmem %s1, 12
      %v461 = vld [vmem:[%s460] sm:$0xf]
      %v463 = vsel %vm211, %v461, 0
      %v466 = vsel %vm215, %v459, 0
      %468 = vmatprep.subr.mxu0 0.0
      %469 = vmatpush1.msra.mxu0 %v466
      %470 = vmatprep.subr.mxu0 0.0
      %471 = vmatpush1.msra.mxu0 0.0
      %472 = vmatprep.subr.mxu0 0.0
      %473 = vmatpush1.msra.mxu0 0.0
      %474 = vmatprep.subr.mxu0 0.0
      %475 = vmatpush1.msra.mxu0 0.0
      %476 = vmatprep.subr.mxu0 0.0
      %477 = vmatpush1.msra.mxu0 0.0
      %478 = vmatprep.subr.mxu0 0.0
      %479 = vmatpush1.msra.mxu0 0.0
      %480 = vmatprep.subr.mxu0 0.0
      %481 = vmatpush1.msra.mxu0 0.0
      %482 = vmatprep.subr.mxu0 0.0
      %483 = vmatpush1.msra.mxu0 0.0
      %484 = vmatprep.subr.mxu0 0.0
      %485 = vmatpush1.msra.mxu0 0.0
      %486 = vmatprep.subr.mxu0 0.0
      %487 = vmatpush1.msra.mxu0 0.0
      %488 = vmatprep.subr.mxu0 0.0
      %489 = vmatpush1.msra.mxu0 0.0
      %490 = vmatprep.subr.mxu0 0.0
      %491 = vmatpush1.msra.mxu0 0.0
      %492 = vmatprep.subr.mxu0 0.0
      %493 = vmatpush1.msra.mxu0 0.0
      %494 = vmatprep.subr.mxu0 0.0
      %495 = vmatpush1.msra.mxu0 0.0
      %496 = vmatprep.subr.mxu0 0.0
      %497 = vmatpush1.msra.mxu0 0.0
      %498 = vmatprep.subr.mxu0 0.0
      %499 = vmatpush1.msra.mxu0 0.0
      %500 = vmatprep.subr.mxu0 0.0
      %501 = vmatpush1.msra.mxu0 0.0
      %502 = vmatprep.subr.mxu0 0.0
      %503 = vmatpush1.msra.mxu0 0.0
      %504 = vmatprep.subr.mxu0 0.0
      %505 = vmatpush1.msra.mxu0 0.0
      %506 = vmatprep.subr.mxu0 0.0
      %507 = vmatpush1.msra.mxu0 0.0
      %508 = vmatprep.subr.mxu0 0.0
      %509 = vmatpush1.msra.mxu0 0.0
      %510 = vmatprep.subr.mxu0 0.0
      %511 = vmatpush1.msra.mxu0 0.0
      %512 = vmatprep.subr.mxu0 0.0
      %513 = vmatpush1.msra.mxu0 0.0
      %514 = vmatprep.subr.mxu0 0.0
      %515 = vmatpush1.msra.mxu0 0.0
      %516 = vmatprep.subr.mxu0 0.0
      %517 = vmatpush1.msra.mxu0 0.0
      %518 = vmatprep.subr.mxu0 0.0
      %519 = vmatpush1.msra.mxu0 0.0
      %520 = vmatprep.subr.mxu0 0.0
      %521 = vmatpush1.msra.mxu0 0.0
      %522 = vmatprep.subr.mxu0 0.0
      %523 = vmatpush1.msra.mxu0 0.0
      %524 = vmatprep.subr.mxu0 0.0
      %525 = vmatpush1.msra.mxu0 0.0
      %526 = vmatprep.subr.mxu0 0.0
      %527 = vmatpush1.msra.mxu0 0.0
      %528 = vmatprep.subr.mxu0 0.0
      %529 = vmatpush1.msra.mxu0 0.0
      %530 = vmatprep.subr.mxu0 0.0
      %531 = vmatpush1.msra.mxu0 0.0
      %532 = vmatprep.mubr.f32.mxu0 0.0
      %533 = vmatmul.mubr.f32.gmra.mrb[0].mxu0 %v463
      %v534 = vpop.f32.mrb[0].mxu0
      %v535 = vadd.f32 0.0, %v534
      %v536 = vpop.f32.mrb[0].mxu0
      %537 = vdwg.mxu0
      %v538 = vadd.f32 %v457, %v535
      %s539 = scalar_lea.vmem %s195, 24
      %v540 = vld [vmem:[%s539] sm:$0xf]
      %s541 = scalar_lea.vmem %s1, 16
      %v542 = vld [vmem:[%s541] sm:$0xf]
      %v544 = vsel %vm211, %v542, 0
      %v547 = vsel %vm215, %v540, 0
      %549 = vmatprep.subr.mxu0 0.0
      %550 = vmatpush1.msra.mxu0 %v547
      %551 = vmatprep.subr.mxu0 0.0
      %552 = vmatpush1.msra.mxu0 0.0
      %553 = vmatprep.subr.mxu0 0.0
      %554 = vmatpush1.msra.mxu0 0.0
      %555 = vmatprep.subr.mxu0 0.0
      %556 = vmatpush1.msra.mxu0 0.0
      %557 = vmatprep.subr.mxu0 0.0
      %558 = vmatpush1.msra.mxu0 0.0
      %559 = vmatprep.subr.mxu0 0.0
      %560 = vmatpush1.msra.mxu0 0.0
      %561 = vmatprep.subr.mxu0 0.0
      %562 = vmatpush1.msra.mxu0 0.0
      %563 = vmatprep.subr.mxu0 0.0
      %564 = vmatpush1.msra.mxu0 0.0
      %565 = vmatprep.subr.mxu0 0.0
      %566 = vmatpush1.msra.mxu0 0.0
      %567 = vmatprep.subr.mxu0 0.0
      %568 = vmatpush1.msra.mxu0 0.0
      %569 = vmatprep.subr.mxu0 0.0
      %570 = vmatpush1.msra.mxu0 0.0
      %571 = vmatprep.subr.mxu0 0.0
      %572 = vmatpush1.msra.mxu0 0.0
      %573 = vmatprep.subr.mxu0 0.0
      %574 = vmatpush1.msra.mxu0 0.0
      %575 = vmatprep.subr.mxu0 0.0
      %576 = vmatpush1.msra.mxu0 0.0
      %577 = vmatprep.subr.mxu0 0.0
      %578 = vmatpush1.msra.mxu0 0.0
      %579 = vmatprep.subr.mxu0 0.0
      %580 = vmatpush1.msra.mxu0 0.0
      %581 = vmatprep.subr.mxu0 0.0
      %582 = vmatpush1.msra.mxu0 0.0
      %583 = vmatprep.subr.mxu0 0.0
      %584 = vmatpush1.msra.mxu0 0.0
      %585 = vmatprep.subr.mxu0 0.0
      %586 = vmatpush1.msra.mxu0 0.0
      %587 = vmatprep.subr.mxu0 0.0
      %588 = vmatpush1.msra.mxu0 0.0
      %589 = vmatprep.subr.mxu0 0.0
      %590 = vmatpush1.msra.mxu0 0.0
      %591 = vmatprep.subr.mxu0 0.0
      %592 = vmatpush1.msra.mxu0 0.0
      %593 = vmatprep.subr.mxu0 0.0
      %594 = vmatpush1.msra.mxu0 0.0
      %595 = vmatprep.subr.mxu0 0.0
      %596 = vmatpush1.msra.mxu0 0.0
      %597 = vmatprep.subr.mxu0 0.0
      %598 = vmatpush1.msra.mxu0 0.0
      %599 = vmatprep.subr.mxu0 0.0
      %600 = vmatpush1.msra.mxu0 0.0
      %601 = vmatprep.subr.mxu0 0.0
      %602 = vmatpush1.msra.mxu0 0.0
      %603 = vmatprep.subr.mxu0 0.0
      %604 = vmatpush1.msra.mxu0 0.0
      %605 = vmatprep.subr.mxu0 0.0
      %606 = vmatpush1.msra.mxu0 0.0
      %607 = vmatprep.subr.mxu0 0.0
      %608 = vmatpush1.msra.mxu0 0.0
      %609 = vmatprep.subr.mxu0 0.0
      %610 = vmatpush1.msra.mxu0 0.0
      %611 = vmatprep.subr.mxu0 0.0
      %612 = vmatpush1.msra.mxu0 0.0
      %613 = vmatprep.mubr.f32.mxu0 0.0
      %614 = vmatmul.mubr.f32.gmra.mrb[0].mxu0 %v544
      %v615 = vpop.f32.mrb[0].mxu0
      %v616 = vadd.f32 0.0, %v615
      %v617 = vpop.f32.mrb[0].mxu0
      %618 = vdwg.mxu0
      %v619 = vadd.f32 %v538, %v616
      %v620 = vld [vmem:[%s458] sm:$0xff]
      %s621 = scalar_lea.vmem %s1, 20
      %v622 = vld [vmem:[%s621] sm:$0xf]
      %v624 = vcombine.high %v620, %v620
      %625 = vrot.lane.b32.xlu0 %v620, 127
      %v626 = vpop.permute.xlu0 %625
      %627 = vrot.lane.b32.xlu0 %v624, 127
      %v628 = vpop.permute.xlu0 %627
      %v629 = vsel %vm380, %v626, %v628
      %v631 = vsel %vm211, %v622, 0
      %v633 = vsel %vm215, %v629, 0
      %635 = vmatprep.subr.mxu0 0.0
      %636 = vmatpush1.msra.mxu0 %v633
      %637 = vmatprep.subr.mxu0 0.0
      %638 = vmatpush1.msra.mxu0 0.0
      %639 = vmatprep.subr.mxu0 0.0
      %640 = vmatpush1.msra.mxu0 0.0
      %641 = vmatprep.subr.mxu0 0.0
      %642 = vmatpush1.msra.mxu0 0.0
      %643 = vmatprep.subr.mxu0 0.0
      %644 = vmatpush1.msra.mxu0 0.0
      %645 = vmatprep.subr.mxu0 0.0
      %646 = vmatpush1.msra.mxu0 0.0
      %647 = vmatprep.subr.mxu0 0.0
      %648 = vmatpush1.msra.mxu0 0.0
      %649 = vmatprep.subr.mxu0 0.0
      %650 = vmatpush1.msra.mxu0 0.0
      %651 = vmatprep.subr.mxu0 0.0
      %652 = vmatpush1.msra.mxu0 0.0
      %653 = vmatprep.subr.mxu0 0.0
      %654 = vmatpush1.msra.mxu0 0.0
      %655 = vmatprep.subr.mxu0 0.0
      %656 = vmatpush1.msra.mxu0 0.0
      %657 = vmatprep.subr.mxu0 0.0
      %658 = vmatpush1.msra.mxu0 0.0
      %659 = vmatprep.subr.mxu0 0.0
      %660 = vmatpush1.msra.mxu0 0.0
      %661 = vmatprep.subr.mxu0 0.0
      %662 = vmatpush1.msra.mxu0 0.0
      %663 = vmatprep.subr.mxu0 0.0
      %664 = vmatpush1.msra.mxu0 0.0
      %665 = vmatprep.subr.mxu0 0.0
      %666 = vmatpush1.msra.mxu0 0.0
      %667 = vmatprep.subr.mxu0 0.0
      %668 = vmatpush1.msra.mxu0 0.0
      %669 = vmatprep.subr.mxu0 0.0
      %670 = vmatpush1.msra.mxu0 0.0
      %671 = vmatprep.subr.mxu0 0.0
      %672 = vmatpush1.msra.mxu0 0.0
      %673 = vmatprep.subr.mxu0 0.0
      %674 = vmatpush1.msra.mxu0 0.0
      %675 = vmatprep.subr.mxu0 0.0
      %676 = vmatpush1.msra.mxu0 0.0
      %677 = vmatprep.subr.mxu0 0.0
      %678 = vmatpush1.msra.mxu0 0.0
      %679 = vmatprep.subr.mxu0 0.0
      %680 = vmatpush1.msra.mxu0 0.0
      %681 = vmatprep.subr.mxu0 0.0
      %682 = vmatpush1.msra.mxu0 0.0
      %683 = vmatprep.subr.mxu0 0.0
      %684 = vmatpush1.msra.mxu0 0.0
      %685 = vmatprep.subr.mxu0 0.0
      %686 = vmatpush1.msra.mxu0 0.0
      %687 = vmatprep.subr.mxu0 0.0
      %688 = vmatpush1.msra.mxu0 0.0
      %689 = vmatprep.subr.mxu0 0.0
      %690 = vmatpush1.msra.mxu0 0.0
      %691 = vmatprep.subr.mxu0 0.0
      %692 = vmatpush1.msra.mxu0 0.0
      %693 = vmatprep.subr.mxu0 0.0
      %694 = vmatpush1.msra.mxu0 0.0
      %695 = vmatprep.subr.mxu0 0.0
      %696 = vmatpush1.msra.mxu0 0.0
      %697 = vmatprep.subr.mxu0 0.0
      %698 = vmatpush1.msra.mxu0 0.0
      %699 = vmatprep.mubr.f32.mxu0 0.0
      %700 = vmatmul.mubr.f32.gmra.mrb[0].mxu0 %v631
      %v701 = vpop.f32.mrb[0].mxu0
      %v702 = vadd.f32 0.0, %v701
      %v703 = vpop.f32.mrb[0].mxu0
      %704 = vdwg.mxu0
      %v705 = vadd.f32 %v619, %v702
      %v706 = vld [vmem:[%s195] sm:$0xff]
      %s707 = scalar_lea.vmem %s1, 24
      %v708 = vld [vmem:[%s707] sm:$0xf]
      %v710 = vcombine.high %v706, %v706
      %711 = vrot.lane.b32.xlu0 %v706, 119
      %v712 = vpop.permute.xlu0 %711
      %713 = vrot.lane.b32.xlu0 %v710, 119
      %v714 = vpop.permute.xlu0 %713
      %vm715 = vcmask 973824
      %v716 = vsel %vm715, %v712, %v714
      %v718 = vsel %vm211, %v708, 0
      %v720 = vsel %vm215, %v716, 0
      %722 = vmatprep.subr.mxu0 0.0
      %723 = vmatpush1.msra.mxu0 %v720
      %724 = vmatprep.subr.mxu0 0.0
      %725 = vmatpush1.msra.mxu0 0.0
      %726 = vmatprep.subr.mxu0 0.0
      %727 = vmatpush1.msra.mxu0 0.0
      %728 = vmatprep.subr.mxu0 0.0
      %729 = vmatpush1.msra.mxu0 0.0
      %730 = vmatprep.subr.mxu0 0.0
      %731 = vmatpush1.msra.mxu0 0.0
      %732 = vmatprep.subr.mxu0 0.0
      %733 = vmatpush1.msra.mxu0 0.0
      %734 = vmatprep.subr.mxu0 0.0
      %735 = vmatpush1.msra.mxu0 0.0
      %736 = vmatprep.subr.mxu0 0.0
      %737 = vmatpush1.msra.mxu0 0.0
      %738 = vmatprep.subr.mxu0 0.0
      %739 = vmatpush1.msra.mxu0 0.0
      %740 = vmatprep.subr.mxu0 0.0
      %741 = vmatpush1.msra.mxu0 0.0
      %742 = vmatprep.subr.mxu0 0.0
      %743 = vmatpush1.msra.mxu0 0.0
      %744 = vmatprep.subr.mxu0 0.0
      %745 = vmatpush1.msra.mxu0 0.0
      %746 = vmatprep.subr.mxu0 0.0
      %747 = vmatpush1.msra.mxu0 0.0
      %748 = vmatprep.subr.mxu0 0.0
      %749 = vmatpush1.msra.mxu0 0.0
      %750 = vmatprep.subr.mxu0 0.0
      %751 = vmatpush1.msra.mxu0 0.0
      %752 = vmatprep.subr.mxu0 0.0
      %753 = vmatpush1.msra.mxu0 0.0
      %754 = vmatprep.subr.mxu0 0.0
      %755 = vmatpush1.msra.mxu0 0.0
      %756 = vmatprep.subr.mxu0 0.0
      %757 = vmatpush1.msra.mxu0 0.0
      %758 = vmatprep.subr.mxu0 0.0
      %759 = vmatpush1.msra.mxu0 0.0
      %760 = vmatprep.subr.mxu0 0.0
      %761 = vmatpush1.msra.mxu0 0.0
      %762 = vmatprep.subr.mxu0 0.0
      %763 = vmatpush1.msra.mxu0 0.0
      %764 = vmatprep.subr.mxu0 0.0
      %765 = vmatpush1.msra.mxu0 0.0
      %766 = vmatprep.subr.mxu0 0.0
      %767 = vmatpush1.msra.mxu0 0.0
      %768 = vmatprep.subr.mxu0 0.0
      %769 = vmatpush1.msra.mxu0 0.0
      %770 = vmatprep.subr.mxu0 0.0
      %771 = vmatpush1.msra.mxu0 0.0
      %772 = vmatprep.subr.mxu0 0.0
      %773 = vmatpush1.msra.mxu0 0.0
      %774 = vmatprep.subr.mxu0 0.0
      %775 = vmatpush1.msra.mxu0 0.0
      %776 = vmatprep.subr.mxu0 0.0
      %777 = vmatpush1.msra.mxu0 0.0
      %778 = vmatprep.subr.mxu0 0.0
      %779 = vmatpush1.msra.mxu0 0.0
      %780 = vmatprep.subr.mxu0 0.0
      %781 = vmatpush1.msra.mxu0 0.0
      %782 = vmatprep.subr.mxu0 0.0
      %783 = vmatpush1.msra.mxu0 0.0
      %784 = vmatprep.subr.mxu0 0.0
      %785 = vmatpush1.msra.mxu0 0.0
      %786 = vmatprep.mubr.f32.mxu0 0.0
      %787 = vmatmul.mubr.f32.gmra.mrb[0].mxu0 %v718
      %v788 = vpop.f32.mrb[0].mxu0
      %v789 = vadd.f32 0.0, %v788
      %v790 = vpop.f32.mrb[0].mxu0
      %791 = vdwg.mxu0
      %v792 = vadd.f32 %v705, %v789
      %v793 = vld [vmem:[%s290] sm:$0xff]
      %s794 = scalar_lea.vmem %s1, 28
      %v795 = vld [vmem:[%s794] sm:$0xf]
      %v797 = vcombine.high %v793, %v793
      %798 = vrot.lane.b32.xlu0 %v793, 119
      %v799 = vpop.permute.xlu0 %798
      %800 = vrot.lane.b32.xlu0 %v797, 119
      %v801 = vpop.permute.xlu0 %800
      %v802 = vsel %vm715, %v799, %v801
      %v804 = vsel %vm211, %v795, 0
      %v806 = vsel %vm215, %v802, 0
      %808 = vmatprep.subr.mxu0 0.0
      %809 = vmatpush1.msra.mxu0 %v806
      %810 = vmatprep.subr.mxu0 0.0
      %811 = vmatpush1.msra.mxu0 0.0
      %812 = vmatprep.subr.mxu0 0.0
      %813 = vmatpush1.msra.mxu0 0.0
      %814 = vmatprep.subr.mxu0 0.0
      %815 = vmatpush1.msra.mxu0 0.0
      %816 = vmatprep.subr.mxu0 0.0
      %817 = vmatpush1.msra.mxu0 0.0
      %818 = vmatprep.subr.mxu0 0.0
      %819 = vmatpush1.msra.mxu0 0.0
      %820 = vmatprep.subr.mxu0 0.0
      %821 = vmatpush1.msra.mxu0 0.0
      %822 = vmatprep.subr.mxu0 0.0
      %823 = vmatpush1.msra.mxu0 0.0
      %824 = vmatprep.subr.mxu0 0.0
      %825 = vmatpush1.msra.mxu0 0.0
      %826 = vmatprep.subr.mxu0 0.0
      %827 = vmatpush1.msra.mxu0 0.0
      %828 = vmatprep.subr.mxu0 0.0
      %829 = vmatpush1.msra.mxu0 0.0
      %830 = vmatprep.subr.mxu0 0.0
      %831 = vmatpush1.msra.mxu0 0.0
      %832 = vmatprep.subr.mxu0 0.0
      %833 = vmatpush1.msra.mxu0 0.0
      %834 = vmatprep.subr.mxu0 0.0
      %835 = vmatpush1.msra.mxu0 0.0
      %836 = vmatprep.subr.mxu0 0.0
      %837 = vmatpush1.msra.mxu0 0.0
      %838 = vmatprep.subr.mxu0 0.0
      %839 = vmatpush1.msra.mxu0 0.0
      %840 = vmatprep.subr.mxu0 0.0
      %841 = vmatpush1.msra.mxu0 0.0
      %842 = vmatprep.subr.mxu0 0.0
      %843 = vmatpush1.msra.mxu0 0.0
      %844 = vmatprep.subr.mxu0 0.0
      %845 = vmatpush1.msra.mxu0 0.0
      %846 = vmatprep.subr.mxu0 0.0
      %847 = vmatpush1.msra.mxu0 0.0
      %848 = vmatprep.subr.mxu0 0.0
      %849 = vmatpush1.msra.mxu0 0.0
      %850 = vmatprep.subr.mxu0 0.0
      %851 = vmatpush1.msra.mxu0 0.0
      %852 = vmatprep.subr.mxu0 0.0
      %853 = vmatpush1.msra.mxu0 0.0
      %854 = vmatprep.subr.mxu0 0.0
      %855 = vmatpush1.msra.mxu0 0.0
      %856 = vmatprep.subr.mxu0 0.0
      %857 = vmatpush1.msra.mxu0 0.0
      %858 = vmatprep.subr.mxu0 0.0
      %859 = vmatpush1.msra.mxu0 0.0
      %860 = vmatprep.subr.mxu0 0.0
      %861 = vmatpush1.msra.mxu0 0.0
      %862 = vmatprep.subr.mxu0 0.0
      %863 = vmatpush1.msra.mxu0 0.0
      %864 = vmatprep.subr.mxu0 0.0
      %865 = vmatpush1.msra.mxu0 0.0
      %866 = vmatprep.subr.mxu0 0.0
      %867 = vmatpush1.msra.mxu0 0.0
      %868 = vmatprep.subr.mxu0 0.0
      %869 = vmatpush1.msra.mxu0 0.0
      %870 = vmatprep.subr.mxu0 0.0
      %871 = vmatpush1.msra.mxu0 0.0
      %872 = vmatprep.mubr.f32.mxu0 0.0
      %873 = vmatmul.mubr.f32.gmra.mrb[0].mxu0 %v804
      %v874 = vpop.f32.mrb[0].mxu0
      %v875 = vadd.f32 0.0, %v874
      %v876 = vpop.f32.mrb[0].mxu0
      %877 = vdwg.mxu0
      %v878 = vadd.f32 %v792, %v875
      %v879 = vld [vmem:[%s195] sm:$0xff]
      %s880 = scalar_lea.vmem %s1, 32
      %v881 = vld [vmem:[%s880] sm:$0xf]
      %v883 = vcombine.high %v879, %v879
      %884 = vrot.lane.b32.xlu0 %v879, 118
      %v885 = vpop.permute.xlu0 %884
      %886 = vrot.lane.b32.xlu0 %v883, 118
      %v887 = vpop.permute.xlu0 %886
      %vm888 = vcmask 965632
      %v889 = vsel %vm888, %v885, %v887
      %v891 = vsel %vm211, %v881, 0
      %v893 = vsel %vm215, %v889, 0
      %895 = vmatprep.subr.mxu0 0.0
      %896 = vmatpush1.msra.mxu0 %v893
      %897 = vmatprep.subr.mxu0 0.0
      %898 = vmatpush1.msra.mxu0 0.0
      %899 = vmatprep.subr.mxu0 0.0
      %900 = vmatpush1.msra.mxu0 0.0
      %901 = vmatprep.subr.mxu0 0.0
      %902 = vmatpush1.msra.mxu0 0.0
      %903 = vmatprep.subr.mxu0 0.0
      %904 = vmatpush1.msra.mxu0 0.0
      %905 = vmatprep.subr.mxu0 0.0
      %906 = vmatpush1.msra.mxu0 0.0
      %907 = vmatprep.subr.mxu0 0.0
      %908 = vmatpush1.msra.mxu0 0.0
      %909 = vmatprep.subr.mxu0 0.0
      %910 = vmatpush1.msra.mxu0 0.0
      %911 = vmatprep.subr.mxu0 0.0
      %912 = vmatpush1.msra.mxu0 0.0
      %913 = vmatprep.subr.mxu0 0.0
      %914 = vmatpush1.msra.mxu0 0.0
      %915 = vmatprep.subr.mxu0 0.0
      %916 = vmatpush1.msra.mxu0 0.0
      %917 = vmatprep.subr.mxu0 0.0
      %918 = vmatpush1.msra.mxu0 0.0
      %919 = vmatprep.subr.mxu0 0.0
      %920 = vmatpush1.msra.mxu0 0.0
      %921 = vmatprep.subr.mxu0 0.0
      %922 = vmatpush1.msra.mxu0 0.0
      %923 = vmatprep.subr.mxu0 0.0
      %924 = vmatpush1.msra.mxu0 0.0
      %925 = vmatprep.subr.mxu0 0.0
      %926 = vmatpush1.msra.mxu0 0.0
      %927 = vmatprep.subr.mxu0 0.0
      %928 = vmatpush1.msra.mxu0 0.0
      %929 = vmatprep.subr.mxu0 0.0
      %930 = vmatpush1.msra.mxu0 0.0
      %931 = vmatprep.subr.mxu0 0.0
      %932 = vmatpush1.msra.mxu0 0.0
      %933 = vmatprep.subr.mxu0 0.0
      %934 = vmatpush1.msra.mxu0 0.0
      %935 = vmatprep.subr.mxu0 0.0
      %936 = vmatpush1.msra.mxu0 0.0
      %937 = vmatprep.subr.mxu0 0.0
      %938 = vmatpush1.msra.mxu0 0.0
      %939 = vmatprep.subr.mxu0 0.0
      %940 = vmatpush1.msra.mxu0 0.0
      %941 = vmatprep.subr.mxu0 0.0
      %942 = vmatpush1.msra.mxu0 0.0
      %943 = vmatprep.subr.mxu0 0.0
      %944 = vmatpush1.msra.mxu0 0.0
      %945 = vmatprep.subr.mxu0 0.0
      %946 = vmatpush1.msra.mxu0 0.0
      %947 = vmatprep.subr.mxu0 0.0
      %948 = vmatpush1.msra.mxu0 0.0
      %949 = vmatprep.subr.mxu0 0.0
      %950 = vmatpush1.msra.mxu0 0.0
      %951 = vmatprep.subr.mxu0 0.0
      %952 = vmatpush1.msra.mxu0 0.0
      %953 = vmatprep.subr.mxu0 0.0
      %954 = vmatpush1.msra.mxu0 0.0
      %955 = vmatprep.subr.mxu0 0.0
      %956 = vmatpush1.msra.mxu0 0.0
      %957 = vmatprep.subr.mxu0 0.0
      %958 = vmatpush1.msra.mxu0 0.0
      %959 = vmatprep.mubr.f32.mxu0 0.0
      %960 = vmatmul.mubr.f32.gmra.mrb[0].mxu0 %v891
      %v961 = vpop.f32.mrb[0].mxu0
      %v962 = vadd.f32 0.0, %v961
      %v963 = vpop.f32.mrb[0].mxu0
      %964 = vdwg.mxu0
      %v965 = vadd.f32 %v878, %v962
      %966 = vst [vmem:[%s202] sm:$0xf] %v965
      %p967 = scmp.lt.s32.totalorder %s18, 1
      %s968 = scalar_select %p967, %s18, 1
      %p969 = scmp.lt.s32.totalorder %s19, 0
      %s970 = scalar_select %p969, %s19, 0
      %s971 = sadd.s32 %s970, %s968
      %s972 = smul.addr %s971, 4
      %s973 = scalar_lea.vmem %s3, %s972
      // Predicated region
      $region33: #{downsample_conv.1} parent=31 // pred_check
        %p974 = pneg %p116
      $region34: #{downsample_conv.1} parent=31 // pred_check_branch
        %976 = sbr.rel (%p974) target = $region36
      $region35: #{downsample_conv.1} parent=31 // pred_region
        _
      $region36: #{downsample_conv.1} parent=31 // pred_fallthru
        _
    $region32: #{downsample_conv.1} parent=5 // pred_fallthru
      _
    %p977 = scmp.le.s32.totalorder 2, %s9
    // Predicated region
    $region37: #{downsample_conv.1} parent=5 // pred_check
      %p978 = pneg %p977
    $region38: #{downsample_conv.1} parent=5 // pred_check_branch
      %980 = sbr.rel (%p978) target = $region40
    $region39: #{downsample_conv.1} parent=5 // pred_region
      %s981 = ssub.s32 %s9, 2
      // Predicated region
      $region41: #{downsample_conv.1} parent=39 // pred_check
        %p982 = pneg %p122
      $region42: #{downsample_conv.1} parent=39 // pred_check_branch
        %984 = sbr.rel (%p982) target = $region44
      $region43: #{downsample_conv.1} parent=39 // pred_region
        %p985 = scmp.lt.s32.totalorder %s20, 1
        %s986 = scalar_select %p985, %s20, 1
        %p987 = scmp.lt.s32.totalorder %s21, 0
        %s988 = scalar_select %p987, %s21, 0
        %s989 = sadd.s32 %s988, %s986
        %s990 = smul.addr %s989, 4
        %s991 = scalar_lea.vmem %s3, %s990
      $region44: #{downsample_conv.1} parent=39 // pred_fallthru
        _
    $region40: #{downsample_conv.1} parent=5 // pred_fallthru
      _
  $region6: #{downsample_conv.1} parent=0 // loop_footer
    %s13 = sadd.s32 1, %s9
  $region7: #{downsample_conv.1} parent=0 // loop_footer_branch
    %8 = sbr.rel target = $region3
  $region8: #{downsample_conv.1} parent=0 // loop_exit
    _

</llo_original>
